<compile_context>
chip_gen: v6e
topology: v6e:2x2x1
jax: 0.10.0
libtpu: 0.0.40
codegen_flags: <defaults>
</compile_context>

<pallas_src>
import math
import jax
import jax.numpy as jnp
from jax.experimental import pallas as pl
from jax.experimental.pallas import tpu as pltpu


# ----------------------------- parameter / table setup (glue) ----------------

def sinusoid_table(n_pos: int, d_model: int) -> jnp.ndarray:
    """Same formula used by PositionalEmbedding and FixedEmbedding."""
    position = jnp.arange(n_pos, dtype=jnp.float32)[:, None]
    div_term = jnp.exp(
        jnp.arange(0, d_model, 2, dtype=jnp.float32) * -(math.log(10000.0) / d_model)
    )
    tab = jnp.zeros((n_pos, d_model), dtype=jnp.float32)
    tab = tab.at[:, 0::2].set(jnp.sin(position * div_term))
    tab = tab.at[:, 1::2].set(jnp.cos(position * div_term))
    return tab


def init_token_conv_weight(key, c_in: int, d_model: int) -> jnp.ndarray:
    """Deterministic kaiming_normal_(mode='fan_in', nonlinearity='leaky_relu')
    for Conv1d weight of shape [d_model, c_in, 3] (out, in, k)."""
    fan_in = c_in * 3
    neg_slope = 0.01  # PyTorch default for kaiming with leaky_relu
    gain = math.sqrt(2.0 / (1.0 + neg_slope ** 2))
    std = gain / math.sqrt(fan_in)
    return std * jax.random.normal(key, (d_model, c_in, 3), dtype=jnp.float32)


# Fixed temporal tables (embed_type='fixed', freq='h'), packed into one table.
MONTH_SIZE, DAY_SIZE, WEEKDAY_SIZE, HOUR_SIZE = 13, 32, 7, 24
MONTH_OFF = 0
DAY_OFF = MONTH_OFF + MONTH_SIZE          # 13
WEEKDAY_OFF = DAY_OFF + DAY_SIZE          # 45
HOUR_OFF = WEEKDAY_OFF + WEEKDAY_SIZE     # 52  (52 + 24 = 76 used rows)
TABLE_ROWS = 128                          # padded to a lane-friendly K for the MXU


def build_temporal_table(d_model: int) -> jnp.ndarray:
    tab = jnp.concatenate(
        [
            sinusoid_table(MONTH_SIZE, d_model),
            sinusoid_table(DAY_SIZE, d_model),
            sinusoid_table(WEEKDAY_SIZE, d_model),
            sinusoid_table(HOUR_SIZE, d_model),
        ],
        axis=0,
    )
    return jnp.pad(tab, ((0, TABLE_ROWS - tab.shape[0]), (0, 0)))


# ----------------------------- Pallas kernel ---------------------------------

def data_embedding_kernel(x_ref, w_ref, tab_ref, idx_ref, pe_ref, o_ref):
    """Per (seq-tile, batch-tile) block:
      x_ref:   (TB, TM, 3*c_in)      im2col'd values (circular conv unfolded)
      w_ref:   (3*c_in, d_model)     folded conv weight     (VMEM-resident, constant index)
      tab_ref: (TABLE_ROWS, d_model) packed temporal tables (VMEM-resident, constant index)
      idx_ref: (TB, TM, 4) int32     pre-offset temporal row indices
      pe_ref:  (TM, d_model)         positional tile (constant over inner batch axis -> resident)
      o_ref:   (TB, TM, d_model)     output
    """
    tb, tm, d_model = o_ref.shape
    k_in = x_ref.shape[2]
    rows_n = tb * tm

    # TokenEmbedding: single GEMM over the flattened (TB*TM) row axis.
    x2d = x_ref[...].reshape(rows_n, k_in)
    tok = jnp.dot(x2d, w_ref[...], preferred_element_type=jnp.float32)

    # TemporalEmbedding: fused gather as multi-hot @ table GEMM.  The four
    # index ranges are disjoint, so OR-ing the boolean masks equals the sum of
    # the four one-hots (one astype instead of four).
    idx = idx_ref[...].reshape(rows_n, 4)
    lanes = jax.lax.broadcasted_iota(jnp.int32, (rows_n, TABLE_ROWS), 1)
    hot = ((lanes == idx[:, 0:1]) | (lanes == idx[:, 1:2])
           | (lanes == idx[:, 2:3]) | (lanes == idx[:, 3:4])).astype(jnp.float32)
    temporal = jnp.dot(hot, tab_ref[...], preferred_element_type=jnp.float32)

    # PositionalEmbedding add (broadcast over the batch-tile axis).
    # Dropout is identity in eval mode.
    o_ref[...] = (tok + temporal).reshape(tb, tm, d_model) + pe_ref[...][None]


# ----------------------------- wrapper ---------------------------------------

def _pick_tiles(B: int, L: int, max_rows: int = 1024):
    """Pick (batch_tile, seq_tile) so each block has up to ~max_rows rows.

    Seq tile = largest sublane-friendly divisor of L (cap 1024); if none, the
    full sequence.  Batch tile = largest divisor of B keeping TB*TM <= max_rows
    so that short sequences (Informer L=96/192/...) still get big tiles and the
    ~0.35us per-grid-step overhead is amortized.
    """
    tm = L
    for cand in (1024, 512, 256, 128, 64, 32, 16, 8):
        if L % cand == 0:
            tm = cand
            break
    tb = 1
    for cand in range(B, 0, -1):
        if B % cand == 0 and cand * tm <= max_rows:
            tb = cand
            break
    if tm % 8 != 0:
        # keep the in-kernel (TB,TM,K)->(TB*TM,K) reshape layout-free
        tb = 1
    return tb, tm


def data_embedding(x, x_mark, conv_weight, temporal_table, pe):
    """x: [B, L, c_in] f32; x_mark: [B, L, 4] int (month, day, weekday, hour);
    conv_weight: [d_model, c_in, 3]; temporal_table: [128, d_model]; pe: [L, d_model]."""
    B, L, c_in = x.shape
    d_model = conv_weight.shape[0]
    tb, tm = _pick_tiles(B, L)
    n_lt = L // tm
    n_bt = B // tb

    # im2col for the circular Conv1d(k=3, padding=1, circular): [B, L, 3*c_in]
    xp = jnp.concatenate([x[:, -1:, :], x, x[:, :1, :]], axis=1)        # [B, L+2, c_in]
    x_unf = jnp.concatenate([xp[:, 0:L], xp[:, 1:L + 1], xp[:, 2:L + 2]], axis=-1)

    # folded weight: [3*c_in, d_model], row order matches the im2col column order
    w_taps = jnp.transpose(conv_weight, (2, 1, 0)).astype(jnp.float32)  # [3, c_in, d_model]
    w_cat = jnp.reshape(w_taps, (3 * c_in, d_model))

    # pre-offset temporal indices into the packed table rows: [B, L, 4]
    offs = jnp.array([MONTH_OFF, DAY_OFF, WEEKDAY_OFF, HOUR_OFF], dtype=jnp.int32)
    idx = x_mark.astype(jnp.int32)[:, :, :4] + offs[None, None, :]

    # Grid: (seq-tiles, batch-tiles).  Batch is the INNER axis, so the pe block
    # index (t, 0) is constant across it and Pallas keeps pe resident in VMEM
    # instead of re-fetching it for every batch tile.  Weights / tables use a
    # constant index -> fetched once.  Megacore shards the outer (t) axis, so
    # each TensorCore keeps its own resident pe/w/table copies.
    out = pl.pallas_call(
        data_embedding_kernel,
        out_shape=jax.ShapeDtypeStruct((B, L, d_model), jnp.float32),
        grid_spec=pltpu.PrefetchScalarGridSpec(
            num_scalar_prefetch=0,
            grid=(n_lt, n_bt),
            in_specs=[
                pl.BlockSpec((tb, tm, 3 * c_in), lambda t, b: (b, t, 0)),
                pl.BlockSpec((3 * c_in, d_model), lambda t, b: (0, 0)),
                pl.BlockSpec((TABLE_ROWS, d_model), lambda t, b: (0, 0)),
                pl.BlockSpec((tb, tm, 4), lambda t, b: (b, t, 0)),
                pl.BlockSpec((tm, d_model), lambda t, b: (t, 0)),
            ],
            out_specs=pl.BlockSpec((tb, tm, d_model), lambda t, b: (b, t, 0)),
        ),
        compiler_params=pltpu.CompilerParams(
            dimension_semantics=("parallel", "parallel"),
            # <=1024-row f32 tiles + resident pe/table/weights stay well under
            # 32 MiB even double-buffered; safe on v5e (16 MiB default) and
            # within the ~48 MiB guidance for v7x's 64 MiB VMEM.
            vmem_limit_bytes=32 * 1024 * 1024,
        ),
    )(x_unf, w_cat, temporal_table, idx, pe)
    return out


# ----------------------------- pure-JAX reference ----------------------------

def data_embedding_ref(x, x_mark, conv_weight):
    B, L, c_in = x.shape
    d_model = conv_weight.shape[0]
    xp = jnp.concatenate([x[:, -1:, :], x, x[:, :1, :]], axis=1)
    w_taps = jnp.transpose(conv_weight, (2, 1, 0))
    token = (jnp.einsum("blc,cd->bld", xp[:, 0:L], w_taps[0])
             + jnp.einsum("blc,cd->bld", xp[:, 1:L + 1], w_taps[1])
             + jnp.einsum("blc,cd->bld", xp[:, 2:L + 2], w_taps[2]))
    month_t = sinusoid_table(MONTH_SIZE, d_model)
    day_t = sinusoid_table(DAY_SIZE, d_model)
    weekday_t = sinusoid_table(WEEKDAY_SIZE, d_model)
    hour_t = sinusoid_table(HOUR_SIZE, d_model)
    xm = x_mark.astype(jnp.int32)
    temporal = (hour_t[xm[:, :, 3]] + weekday_t[xm[:, :, 2]]
                + day_t[xm[:, :, 1]] + month_t[xm[:, :, 0]])
    return token + temporal + sinusoid_table(L, d_model)[None]


if __name__ == "__main__":
    # Small demo shapes; d_model=128 keeps the output store lane-dense.
    B, L, c_in, d_model = 2, 16, 4, 128

    key = jax.random.PRNGKey(0)
    k_x, k_w, k_mo, k_dy, k_wd, k_hr = jax.random.split(key, 6)

    x = jax.random.normal(k_x, (B, L, c_in), dtype=jnp.float32)
    # x_mark columns: [month, day, weekday, hour] (freq='h', embed_type='fixed')
    month = jax.random.randint(k_mo, (B, L, 1), 0, 13)
    day = jax.random.randint(k_dy, (B, L, 1), 0, 32)
    weekday = jax.random.randint(k_wd, (B, L, 1), 0, 7)
    hour = jax.random.randint(k_hr, (B, L, 1), 0, 24)
    x_mark = jnp.concatenate([month, day, weekday, hour], axis=-1).astype(jnp.int32)

    conv_weight = init_token_conv_weight(k_w, c_in, d_model)   # [d_model, c_in, 3]
    temporal_table = build_temporal_table(d_model)             # [128, d_model], precomputed once
    pe = sinusoid_table(L, d_model)                            # [L, d_model], precomputed once

    out = data_embedding(x, x_mark, conv_weight, temporal_table, pe)
    out = jax.block_until_ready(out)

    ref = data_embedding_ref(x, x_mark, conv_weight)
    assert out.shape == (B, L, d_model)
    assert jnp.allclose(out, ref, atol=1e-4, rtol=1e-4), "mismatch vs reference"

    print("KERNEL_OK")
</pallas_src>

<mosaic_0001>
module attributes {stable_mosaic.version = 11 : i64} {
  func.func @data_embedding_kernel(%arg0: i32, %arg1: i32, %arg2: memref<2x16x12xf32, #tpu.memory_space<vmem>>, %arg3: memref<12x128xf32, #tpu.memory_space<vmem>>, %arg4: memref<128x128xf32, #tpu.memory_space<vmem>>, %arg5: memref<2x16x4xi32, #tpu.memory_space<vmem>>, %arg6: memref<16x128xf32, #tpu.memory_space<vmem>>, %arg7: memref<2x16x128xf32, #tpu.memory_space<vmem>>) attributes {dimension_semantics = [#tpu.dimension_semantics<parallel>, #tpu.dimension_semantics<parallel>], iteration_bounds = array<i64: 1, 1>, scalar_prefetch = 0 : i64, scratch_operands = 0 : i64, tpu.core_type = #tpu.core_type<tc>, window_params = [{transform_indices = @transform_0, window_bounds = array<i64: 2, 16, 12>}, {pipeline_mode = #tpu.pipeline_mode<synchronous>, transform_indices = @transform_1, window_bounds = array<i64: 12, 128>}, {pipeline_mode = #tpu.pipeline_mode<synchronous>, transform_indices = @transform_2, window_bounds = array<i64: 128, 128>}, {transform_indices = @transform_3, window_bounds = array<i64: 2, 16, 4>}, {transform_indices = @transform_4, window_bounds = array<i64: 16, 128>}, {transform_indices = @transform_5, window_bounds = array<i64: 2, 16, 128>}]} {
    %c0 = arith.constant 0 : index
    %c0_0 = arith.constant 0 : index
    %c0_1 = arith.constant 0 : index
    %0 = vector.load %arg2[%c0, %c0_0, %c0_1] : memref<2x16x12xf32, #tpu.memory_space<vmem>>, vector<2x16x12xf32>
    %1 = vector.shape_cast %0 : vector<2x16x12xf32> to vector<32x12xf32>
    %c0_2 = arith.constant 0 : index
    %c0_3 = arith.constant 0 : index
    %2 = vector.load %arg3[%c0_2, %c0_3] : memref<12x128xf32, #tpu.memory_space<vmem>>, vector<12x128xf32>
    %cst = arith.constant dense<0.000000e+00> : vector<32x128xf32>
    %3 = tpu.matmul %1, %2, %cst {dimension_numbers = #tpu.dot_dimension_numbers<[1], [0], [0], [1], [0, 0, 1, 1], [], []>} : vector<32x12xf32>, vector<12x128xf32>, vector<32x128xf32> -> vector<32x128xf32>
    %c0_4 = arith.constant 0 : index
    %c0_5 = arith.constant 0 : index
    %c0_6 = arith.constant 0 : index
    %4 = vector.load %arg5[%c0_4, %c0_5, %c0_6] : memref<2x16x4xi32, #tpu.memory_space<vmem>>, vector<2x16x4xi32>
    %5 = vector.shape_cast %4 : vector<2x16x4xi32> to vector<32x4xi32>
    %6 = tpu.iota {dimensions = array<i32: 1>} : vector<32x128xi32>
    %7 = vector.extract_strided_slice %5 {offsets = [0, 0], sizes = [32, 1], strides = [1, 1]} : vector<32x4xi32> to vector<32x1xi32>
    %8 = vector.broadcast %7 : vector<32x1xi32> to vector<32x128xi32>
    %9 = arith.cmpi eq, %6, %8 : vector<32x128xi32>
    %10 = vector.extract_strided_slice %5 {offsets = [0, 1], sizes = [32, 1], strides = [1, 1]} : vector<32x4xi32> to vector<32x1xi32>
    %11 = vector.broadcast %10 : vector<32x1xi32> to vector<32x128xi32>
    %12 = arith.cmpi eq, %6, %11 : vector<32x128xi32>
    %13 = arith.ori %9, %12 : vector<32x128xi1>
    %14 = vector.extract_strided_slice %5 {offsets = [0, 2], sizes = [32, 1], strides = [1, 1]} : vector<32x4xi32> to vector<32x1xi32>
    %15 = vector.broadcast %14 : vector<32x1xi32> to vector<32x128xi32>
    %16 = arith.cmpi eq, %6, %15 : vector<32x128xi32>
    %17 = arith.ori %13, %16 : vector<32x128xi1>
    %18 = vector.extract_strided_slice %5 {offsets = [0, 3], sizes = [32, 1], strides = [1, 1]} : vector<32x4xi32> to vector<32x1xi32>
    %19 = vector.broadcast %18 : vector<32x1xi32> to vector<32x128xi32>
    %20 = arith.cmpi eq, %6, %19 : vector<32x128xi32>
    %21 = arith.ori %17, %20 : vector<32x128xi1>
    %22 = arith.extui %21 : vector<32x128xi1> to vector<32x128xi32>
    %23 = arith.sitofp %22 : vector<32x128xi32> to vector<32x128xf32>
    %c0_7 = arith.constant 0 : index
    %c0_8 = arith.constant 0 : index
    %24 = vector.load %arg4[%c0_7, %c0_8] : memref<128x128xf32, #tpu.memory_space<vmem>>, vector<128x128xf32>
    %cst_9 = arith.constant dense<0.000000e+00> : vector<32x128xf32>
    %25 = tpu.matmul %23, %24, %cst_9 {dimension_numbers = #tpu.dot_dimension_numbers<[1], [0], [0], [1], [0, 0, 1, 1], [], []>} : vector<32x128xf32>, vector<128x128xf32>, vector<32x128xf32> -> vector<32x128xf32>
    %26 = arith.addf %3, %25 : vector<32x128xf32>
    %27 = vector.shape_cast %26 : vector<32x128xf32> to vector<2x16x128xf32>
    %c0_10 = arith.constant 0 : index
    %c0_11 = arith.constant 0 : index
    %28 = vector.load %arg6[%c0_10, %c0_11] : memref<16x128xf32, #tpu.memory_space<vmem>>, vector<16x128xf32>
    %29 = vector.shape_cast %28 : vector<16x128xf32> to vector<1x16x128xf32>
    %30 = vector.broadcast %29 : vector<1x16x128xf32> to vector<2x16x128xf32>
    %31 = arith.addf %27, %30 : vector<2x16x128xf32>
    %c0_12 = arith.constant 0 : index
    %c0_13 = arith.constant 0 : index
    %c0_14 = arith.constant 0 : index
    %32 = vector.load %arg7[%c0_12, %c0_13, %c0_14] : memref<2x16x128xf32, #tpu.memory_space<vmem>>, vector<2x16x128xf32>
    tpu.vector_store %arg7[%c0_12, %c0_13, %c0_14], %31 {strides = array<i32>} : memref<2x16x128xf32, #tpu.memory_space<vmem>>, vector<2x16x128xf32>,
    return
  }
  func.func @transform_0(%arg0: i32, %arg1: i32) -> (i32, i32, i32) {
    %c0_i32 = arith.constant 0 : i32
    %c0_i32_0 = arith.constant 0 : i32
    return %arg1, %arg0, %c0_i32 : i32, i32, i32
  }
  func.func @transform_1(%arg0: i32, %arg1: i32) -> (i32, i32) {
    %c0_i32 = arith.constant 0 : i32
    %c0_i32_0 = arith.constant 0 : i32
    %c0_i32_1 = arith.constant 0 : i32
    return %c0_i32, %c0_i32_0 : i32, i32
  }
  func.func @transform_2(%arg0: i32, %arg1: i32) -> (i32, i32) {
    %c0_i32 = arith.constant 0 : i32
    %c0_i32_0 = arith.constant 0 : i32
    %c0_i32_1 = arith.constant 0 : i32
    return %c0_i32, %c0_i32_0 : i32, i32
  }
  func.func @transform_3(%arg0: i32, %arg1: i32) -> (i32, i32, i32) {
    %c0_i32 = arith.constant 0 : i32
    %c0_i32_0 = arith.constant 0 : i32
    return %arg1, %arg0, %c0_i32 : i32, i32, i32
  }
  func.func @transform_4(%arg0: i32, %arg1: i32) -> (i32, i32) {
    %c0_i32 = arith.constant 0 : i32
    %c0_i32_0 = arith.constant 0 : i32
    return %arg0, %c0_i32 : i32, i32
  }
  func.func @transform_5(%arg0: i32, %arg1: i32) -> (i32, i32, i32) {
    %c0_i32 = arith.constant 0 : i32
    %c0_i32_0 = arith.constant 0 : i32
    return %arg1, %arg0, %c0_i32 : i32, i32, i32
  }
}

</mosaic_0001>

<llo_original>
// kernel: tpu_custom_call.1
$region0: #{tpu_custom_call.1}
  #allocation0 [shape = 'u32[]', space=smem, size = 0x4, offset = 0x4, fixed_abs, tag = 'smem constant byte address 0x4 - core index']
  #allocation1 [shape = 'u32[144,128]{1,0:T(1,128)}', space=vmem, size = 0x12000, scoped, tag = 'internal scratch']
  %s0 = inlined_call_operand.vmem [shape: f32[2,16,12], index: 0, kind: input, shape index: {}]
  %s1 = inlined_call_operand.vmem [shape: f32[12,128], index: 1, kind: input, shape index: {}]
  %s2 = inlined_call_operand.hbm [shape: f32[128,128], index: 2, kind: input, shape index: {}]
  %s3 = inlined_call_operand.vmem [shape: s32[2,16,4], index: 3, kind: input, shape index: {}]
  %s4 = inlined_call_operand.vmem [shape: f32[16,128], index: 4, kind: input, shape index: {}]
  %s5 = inlined_call_operand.hbm [shape: f32[2,16,128], index: 5, kind: output, shape index: {}]
  %s6 = sld [smem:[#allocation0]]
  $region34: #{tpu_custom_call.1} parent=0
    _
  %s8 = ssub.s32 1, %s6
  %s9 = scalar_select 0, %s8, %s6
  $region1: #{tpu_custom_call.1} parent=0
    #allocation2 [shape = 'u8[65536]{0}', space=vmem, size = 0x10000, scoped, tag = 'input window, operand 2, single buffered']
    #allocation3 [shape = 's32[1]{0}', space=sflag, size = 0x4, scoped, tag = 'scoped memory for tpu_custom_call.1']
    #allocation4 [shape = 's32[1]{0}', space=sflag, size = 0x4, scoped, tag = 'scoped memory for tpu_custom_call.1']
    #allocation5 [shape = 'u8[16384]{0}', space=vmem, size = 0x4000, scoped, tag = 'output window, operand 0, single buffered']
    %10 = vsyncpa [#allocation3], 0
    %11 = vsyncpa [#allocation4], 0
    // Predicated region
    $region2: #{tpu_custom_call.1} parent=1 // pred_check
      _
    $region3: #{tpu_custom_call.1} parent=1 // pred_check_branch
      %13 = sbr.rel (0) target = $region5
    $region4: #{tpu_custom_call.1} parent=1 // pred_region
      _
    $region5: #{tpu_custom_call.1} parent=1 // pred_fallthru
      _
    // Predicated region
    $region6: #{tpu_custom_call.1} parent=1 // pred_check
      _
    $region7: #{tpu_custom_call.1} parent=1 // pred_check_branch
      %15 = sbr.rel (0) target = $region9
    $region8: #{tpu_custom_call.1} parent=1 // pred_region
      _
    $region9: #{tpu_custom_call.1} parent=1 // pred_fallthru
      _
    // Predicated region
    $region10: #{tpu_custom_call.1} parent=1 // pred_check
      _
    $region11: #{tpu_custom_call.1} parent=1 // pred_check_branch
      %17 = sbr.rel (0) target = $region13
    $region12: #{tpu_custom_call.1} parent=1 // pred_region
      %s19 = ssub.s32 2048, 2048
      %20 = vsyncadd [#allocation3], %s19
      %s21 = sshll.u32 [#allocation2], 4
      %s22 = int_to_ptr.vmem [resolvable:$true] %s21
      %27 = dma.hbm_to_vmem [thread:$0]  %s2, 2048, %s22, [#allocation3], 128, 128, 8
    $region13: #{tpu_custom_call.1} parent=1 // pred_fallthru
      _
    // Predicated region
    $region14: #{tpu_custom_call.1} parent=1 // pred_check
      _
    $region15: #{tpu_custom_call.1} parent=1 // pred_check_branch
      %29 = sbr.rel (0) target = $region17
    $region16: #{tpu_custom_call.1} parent=1 // pred_region
      _
    $region17: #{tpu_custom_call.1} parent=1 // pred_fallthru
      _
    // Predicated region
    $region18: #{tpu_custom_call.1} parent=1 // pred_check
      _
    $region19: #{tpu_custom_call.1} parent=1 // pred_check_branch
      %31 = sbr.rel (0) target = $region21
    $region20: #{tpu_custom_call.1} parent=1 // pred_region
      _
    $region21: #{tpu_custom_call.1} parent=1 // pred_fallthru
      _
    // Predicated region
    $region22: #{tpu_custom_call.1} parent=1 // pred_check
      _
    $region23: #{tpu_custom_call.1} parent=1 // pred_check_branch
      %33 = sbr.rel (0) target = $region25
    $region24: #{tpu_custom_call.1} parent=1 // pred_region
      %34 = dma.done [#allocation3], 2048
    $region25: #{tpu_custom_call.1} parent=1 // pred_fallthru
      _
    %v35 = vld [vmem:[%s0] sm:$0xff]
    %v36 = vld [vmem:[%s0 + $0x8] sm:$0xff]
    %v37 = vld [vmem:[%s0 + $0x10] sm:$0xff]
    %v38 = vld [vmem:[%s0 + $0x18] sm:$0xff]
    %v39 = vld [vmem:[%s1] sm:$0xff]
    %v40 = vld [vmem:[%s1 + $0x8] sm:$0xf]
    %v41 = vld [vmem:[%s3] sm:$0xff]
    %v42 = vld [vmem:[%s3 + $0x8] sm:$0xff]
    %v43 = vld [vmem:[%s3 + $0x10] sm:$0xff]
    %v44 = vld [vmem:[%s3 + $0x18] sm:$0xff]
    %v45 = vlaneseq
    %v46 = vand.u32 %v45, 127
    %47 = vset.pattern.permute.xlu0 0
    %48 = vperm.xlu0 %47, %v41
    %v49 = vpop.permute.xlu0 %48
    %50 = vset.pattern.permute.xlu0 0
    %51 = vperm.xlu0 %50, %v42
    %v52 = vpop.permute.xlu0 %51
    %53 = vset.pattern.permute.xlu0 0
    %54 = vperm.xlu0 %53, %v43
    %v55 = vpop.permute.xlu0 %54
    %56 = vset.pattern.permute.xlu0 0
    %57 = vperm.xlu0 %56, %v44
    %v58 = vpop.permute.xlu0 %57
    %vm59 = vcmp.eq.s32.totalorder %v46, %v49
    %vm60 = vcmp.eq.s32.totalorder %v46, %v52
    %vm61 = vcmp.eq.s32.totalorder %v46, %v55
    %vm62 = vcmp.eq.s32.totalorder %v46, %v58
    %63 = vset.pattern.permute.xlu0 1
    %64 = vperm.xlu0 %63, %v41
    %v65 = vpop.permute.xlu0 %64
    %66 = vset.pattern.permute.xlu0 1
    %67 = vperm.xlu0 %66, %v42
    %v68 = vpop.permute.xlu0 %67
    %69 = vset.pattern.permute.xlu0 1
    %70 = vperm.xlu0 %69, %v43
    %v71 = vpop.permute.xlu0 %70
    %72 = vset.pattern.permute.xlu0 1
    %73 = vperm.xlu0 %72, %v44
    %v74 = vpop.permute.xlu0 %73
    %vm75 = vcmp.eq.s32.totalorder %v46, %v65
    %vm76 = vcmp.eq.s32.totalorder %v46, %v68
    %vm77 = vcmp.eq.s32.totalorder %v46, %v71
    %vm78 = vcmp.eq.s32.totalorder %v46, %v74
    %vm79 = vmor %vm59, %vm75
    %vm80 = vmor %vm60, %vm76
    %vm81 = vmor %vm61, %vm77
    %vm82 = vmor %vm62, %vm78
    %83 = vset.pattern.permute.xlu0 2
    %84 = vperm.xlu0 %83, %v41
    %v85 = vpop.permute.xlu0 %84
    %86 = vset.pattern.permute.xlu0 2
    %87 = vperm.xlu0 %86, %v42
    %v88 = vpop.permute.xlu0 %87
    %89 = vset.pattern.permute.xlu0 2
    %90 = vperm.xlu0 %89, %v43
    %v91 = vpop.permute.xlu0 %90
    %92 = vset.pattern.permute.xlu0 2
    %93 = vperm.xlu0 %92, %v44
    %v94 = vpop.permute.xlu0 %93
    %vm95 = vcmp.eq.s32.totalorder %v46, %v85
    %vm96 = vcmp.eq.s32.totalorder %v46, %v88
    %vm97 = vcmp.eq.s32.totalorder %v46, %v91
    %vm98 = vcmp.eq.s32.totalorder %v46, %v94
    %vm99 = vmor %vm79, %vm95
    %vm100 = vmor %vm80, %vm96
    %vm101 = vmor %vm81, %vm97
    %vm102 = vmor %vm82, %vm98
    %103 = vset.pattern.permute.xlu0 3
    %104 = vperm.xlu0 %103, %v41
    %v105 = vpop.permute.xlu0 %104
    %106 = vset.pattern.permute.xlu0 3
    %107 = vperm.xlu0 %106, %v42
    %v108 = vpop.permute.xlu0 %107
    %109 = vset.pattern.permute.xlu0 3
    %110 = vperm.xlu0 %109, %v43
    %v111 = vpop.permute.xlu0 %110
    %112 = vset.pattern.permute.xlu0 3
    %113 = vperm.xlu0 %112, %v44
    %v114 = vpop.permute.xlu0 %113
    %vm115 = vcmp.eq.s32.totalorder %v46, %v105
    %vm116 = vcmp.eq.s32.totalorder %v46, %v108
    %vm117 = vcmp.eq.s32.totalorder %v46, %v111
    %vm118 = vcmp.eq.s32.totalorder %v46, %v114
    %vm119 = vmor %vm99, %vm115
    %vm120 = vmor %vm100, %vm116
    %vm121 = vmor %vm101, %vm117
    %vm122 = vmor %vm102, %vm118
    %v123 = vsel %vm119, 1, 0
    %v124 = vsel %vm120, 1, 0
    %v125 = vsel %vm121, 1, 0
    %v126 = vsel %vm122, 1, 0
    %v127 = vcvt.s32.f32 %v123
    %v128 = vcvt.s32.f32 %v124
    %v129 = vcvt.s32.f32 %v125
    %v130 = vcvt.s32.f32 %v126
    %v131 = vld [vmem:[#allocation2] sm:$0xff]
    %v132 = vld [vmem:[#allocation2 + $0x8] sm:$0xff]
    %v133 = vld [vmem:[#allocation2 + $0x10] sm:$0xff]
    %v134 = vld [vmem:[#allocation2 + $0x18] sm:$0xff]
    %v135 = vld [vmem:[#allocation2 + $0x20] sm:$0xff]
    %v136 = vld [vmem:[#allocation2 + $0x28] sm:$0xff]
    %v137 = vld [vmem:[#allocation2 + $0x30] sm:$0xff]
    %v138 = vld [vmem:[#allocation2 + $0x38] sm:$0xff]
    %v139 = vld [vmem:[#allocation2 + $0x40] sm:$0xff]
    %v140 = vld [vmem:[#allocation2 + $0x48] sm:$0xff]
    %v141 = vld [vmem:[#allocation2 + $0x50] sm:$0xff]
    %v142 = vld [vmem:[#allocation2 + $0x58] sm:$0xff]
    %v143 = vld [vmem:[#allocation2 + $0x60] sm:$0xff]
    %v144 = vld [vmem:[#allocation2 + $0x68] sm:$0xff]
    %v145 = vld [vmem:[#allocation2 + $0x70] sm:$0xff]
    %v146 = vld [vmem:[#allocation2 + $0x78] sm:$0xff]
    %147 = vmatprep.subr.mxu0 0.0
    %148 = vmatpush1.msra.mxu0 %v146
    %149 = vmatprep.subr.mxu0 0.0
    %150 = vmatpush1.msra.mxu0 %v145
    %151 = vmatprep.subr.mxu0 0.0
    %152 = vmatpush1.msra.mxu0 %v144
    %153 = vmatprep.subr.mxu0 0.0
    %154 = vmatpush1.msra.mxu0 %v143
    %155 = vmatprep.subr.mxu0 0.0
    %156 = vmatpush1.msra.mxu0 %v142
    %157 = vmatprep.subr.mxu0 0.0
    %158 = vmatpush1.msra.mxu0 %v141
    %159 = vmatprep.subr.mxu0 0.0
    %160 = vmatpush1.msra.mxu0 %v140
    %161 = vmatprep.subr.mxu0 0.0
    %162 = vmatpush1.msra.mxu0 %v139
    %163 = vmatprep.subr.mxu0 0.0
    %164 = vmatpush1.msra.mxu0 %v138
    %165 = vmatprep.subr.mxu0 0.0
    %166 = vmatpush1.msra.mxu0 %v137
    %167 = vmatprep.subr.mxu0 0.0
    %168 = vmatpush1.msra.mxu0 %v136
    %169 = vmatprep.subr.mxu0 0.0
    %170 = vmatpush1.msra.mxu0 %v135
    %171 = vmatprep.subr.mxu0 0.0
    %172 = vmatpush1.msra.mxu0 %v134
    %173 = vmatprep.subr.mxu0 0.0
    %174 = vmatpush1.msra.mxu0 %v133
    %175 = vmatprep.subr.mxu0 0.0
    %176 = vmatpush1.msra.mxu0 %v132
    %177 = vmatprep.subr.mxu0 0.0
    %178 = vmatpush1.msra.mxu0 %v131
    %179 = vmatprep.subr.mxu0 0.0
    %180 = vmatpush2.msra.mxu0 0.0
    %181 = vmatprep.subr.mxu0 0.0
    %182 = vmatpush2.msra.mxu0 0.0
    %183 = vmatprep.subr.mxu0 0.0
    %184 = vmatpush2.msra.mxu0 0.0
    %185 = vmatprep.subr.mxu0 0.0
    %186 = vmatpush2.msra.mxu0 0.0
    %187 = vmatprep.subr.mxu0 0.0
    %188 = vmatpush2.msra.mxu0 0.0
    %189 = vmatprep.subr.mxu0 0.0
    %190 = vmatpush2.msra.mxu0 0.0
    %191 = vmatprep.subr.mxu0 0.0
    %192 = vmatpush2.msra.mxu0 0.0
    %193 = vmatprep.subr.mxu0 0.0
    %194 = vmatpush2.msra.mxu0 0.0
    %195 = vmatprep.subr.mxu0 0.0
    %196 = vmatpush2.msra.mxu0 0.0
    %197 = vmatprep.subr.mxu0 0.0
    %198 = vmatpush2.msra.mxu0 0.0
    %199 = vmatprep.subr.mxu0 0.0
    %200 = vmatpush2.msra.mxu0 0.0
    %201 = vmatprep.subr.mxu0 0.0
    %202 = vmatpush2.msra.mxu0 0.0
    %203 = vmatprep.subr.mxu0 0.0
    %204 = vmatpush2.msra.mxu0 0.0
    %205 = vmatprep.subr.mxu0 0.0
    %206 = vmatpush2.msra.mxu0 0.0
    %207 = vmatprep.subr.mxu0 0.0
    %208 = vmatpush2.msra.mxu0 0.0
    %209 = vmatprep.subr.mxu0 0.0
    %210 = vmatpush2.msra.mxu0 0.0
    %211 = vmatprep.mubr.f32.mxu0 0.0
    %212 = vmatmul.mubr.f32.gmra.mxu0 %v127
    %v213 = vpop.f32.mrf.mxu0
    %v214 = vadd.f32 0.0, %v213
    %v215 = vpop.f32.mrf.mxu0
    %216 = vmatprep.mubr.f32.mxu0 0.0
    %217 = vmatmul.mubr.f32.gmra.mxu0 %v128
    %v218 = vpop.f32.mrf.mxu0
    %v219 = vadd.f32 0.0, %v218
    %v220 = vpop.f32.mrf.mxu0
    %221 = vmatprep.mubr.f32.mxu0 0.0
    %222 = vmatmul.mubr.f32.gmra.mxu0 %v129
    %v223 = vpop.f32.mrf.mxu0
    %v224 = vadd.f32 0.0, %v223
    %v225 = vpop.f32.mrf.mxu0
    %226 = vmatprep.mubr.f32.mxu0 0.0
    %227 = vmatmul.mubr.f32.gmra.mxu0 %v130
    %v228 = vpop.f32.mrf.mxu0
    %v229 = vadd.f32 0.0, %v228
    %v230 = vpop.f32.mrf.mxu0
    %231 = vdwg.mxu0
    %vm232 = vcmask 97280
    %v234 = vsel %vm232, %v35, 0
    %v237 = vsel %vm232, %v36, 0
    %v240 = vsel %vm232, %v37, 0
    %v243 = vsel %vm232, %v38, 0
    %vm245 = vcmask 1043456
    %v247 = vsel %vm245, %v40, 0
    %249 = vmatprep.subr.mxu0 0.0
    %250 = vmatpush1.msra.mxu0 0.0
    %251 = vmatprep.subr.mxu0 0.0
    %252 = vmatpush1.msra.mxu0 0.0
    %253 = vmatprep.subr.mxu0 0.0
    %254 = vmatpush1.msra.mxu0 0.0
    %255 = vmatprep.subr.mxu0 0.0
    %256 = vmatpush1.msra.mxu0 0.0
    %257 = vmatprep.subr.mxu0 0.0
    %258 = vmatpush1.msra.mxu0 0.0
    %259 = vmatprep.subr.mxu0 0.0
    %260 = vmatpush1.msra.mxu0 0.0
    %261 = vmatprep.subr.mxu0 0.0
    %262 = vmatpush1.msra.mxu0 0.0
    %263 = vmatprep.subr.mxu0 0.0
    %264 = vmatpush1.msra.mxu0 0.0
    %265 = vmatprep.subr.mxu0 0.0
    %266 = vmatpush1.msra.mxu0 0.0
    %267 = vmatprep.subr.mxu0 0.0
    %268 = vmatpush1.msra.mxu0 0.0
    %269 = vmatprep.subr.mxu0 0.0
    %270 = vmatpush1.msra.mxu0 0.0
    %271 = vmatprep.subr.mxu0 0.0
    %272 = vmatpush1.msra.mxu0 0.0
    %273 = vmatprep.subr.mxu0 0.0
    %274 = vmatpush1.msra.mxu0 0.0
    %275 = vmatprep.subr.mxu0 0.0
    %276 = vmatpush1.msra.mxu0 0.0
    %277 = vmatprep.subr.mxu0 0.0
    %278 = vmatpush1.msra.mxu0 %v247
    %279 = vmatprep.subr.mxu0 0.0
    %280 = vmatpush1.msra.mxu0 %v39
    %281 = vmatprep.subr.mxu0 0.0
    %282 = vmatpush2.msra.mxu0 0.0
    %283 = vmatprep.subr.mxu0 0.0
    %284 = vmatpush2.msra.mxu0 0.0
    %285 = vmatprep.subr.mxu0 0.0
    %286 = vmatpush2.msra.mxu0 0.0
    %287 = vmatprep.subr.mxu0 0.0
    %288 = vmatpush2.msra.mxu0 0.0
    %289 = vmatprep.subr.mxu0 0.0
    %290 = vmatpush2.msra.mxu0 0.0
    %291 = vmatprep.subr.mxu0 0.0
    %292 = vmatpush2.msra.mxu0 0.0
    %293 = vmatprep.subr.mxu0 0.0
    %294 = vmatpush2.msra.mxu0 0.0
    %295 = vmatprep.subr.mxu0 0.0
    %296 = vmatpush2.msra.mxu0 0.0
    %297 = vmatprep.subr.mxu0 0.0
    %298 = vmatpush2.msra.mxu0 0.0
    %299 = vmatprep.subr.mxu0 0.0
    %300 = vmatpush2.msra.mxu0 0.0
    %301 = vmatprep.subr.mxu0 0.0
    %302 = vmatpush2.msra.mxu0 0.0
    %303 = vmatprep.subr.mxu0 0.0
    %304 = vmatpush2.msra.mxu0 0.0
    %305 = vmatprep.subr.mxu0 0.0
    %306 = vmatpush2.msra.mxu0 0.0
    %307 = vmatprep.subr.mxu0 0.0
    %308 = vmatpush2.msra.mxu0 0.0
    %309 = vmatprep.subr.mxu0 0.0
    %310 = vmatpush2.msra.mxu0 0.0
    %311 = vmatprep.subr.mxu0 0.0
    %312 = vmatpush2.msra.mxu0 0.0
    %313 = vmatprep.mubr.f32.mxu0 0.0
    %314 = vmatmul.mubr.f32.gmra.mxu0 %v234
    %v315 = vpop.f32.mrf.mxu0
    %v316 = vadd.f32 %v214, %v315
    %v317 = vpop.f32.mrf.mxu0
    %318 = vmatprep.mubr.f32.mxu0 0.0
    %319 = vmatmul.mubr.f32.gmra.mxu0 %v237
    %v320 = vpop.f32.mrf.mxu0
    %v321 = vadd.f32 %v219, %v320
    %v322 = vpop.f32.mrf.mxu0
    %323 = vmatprep.mubr.f32.mxu0 0.0
    %324 = vmatmul.mubr.f32.gmra.mxu0 %v240
    %v325 = vpop.f32.mrf.mxu0
    %v326 = vadd.f32 %v224, %v325
    %v327 = vpop.f32.mrf.mxu0
    %328 = vmatprep.mubr.f32.mxu0 0.0
    %329 = vmatmul.mubr.f32.gmra.mxu0 %v243
    %v330 = vpop.f32.mrf.mxu0
    %v331 = vadd.f32 %v229, %v330
    %v332 = vpop.f32.mrf.mxu0
    %333 = vdwg.mxu0
    %v334 = vld [vmem:[%s4] sm:$0xff]
    %v335 = vld [vmem:[%s4 + $0x8] sm:$0xff]
    %v336 = vadd.f32 %v316, %v334
    %v337 = vadd.f32 %v321, %v335
    %v338 = vadd.f32 %v326, %v334
    %v339 = vadd.f32 %v331, %v335
    %340 = vst [vmem:[#allocation5] sm:$0xff] %v336
    %341 = vst [vmem:[#allocation5 + $0x8] sm:$0xff] %v337
    %342 = vst [vmem:[#allocation5 + $0x10] sm:$0xff] %v338
    %343 = vst [vmem:[#allocation5 + $0x18] sm:$0xff] %v339
    // Predicated region
    $region26: #{tpu_custom_call.1} parent=1 // pred_check
      _
    $region27: #{tpu_custom_call.1} parent=1 // pred_check_branch
      %345 = sbr.rel (0) target = $region29
    $region28: #{tpu_custom_call.1} parent=1 // pred_region
      %s347 = ssub.s32 512, 512
      %348 = vsyncadd [#allocation4], %s347
      %s349 = sshll.u32 [#allocation5], 4
      %s350 = int_to_ptr.vmem [resolvable:$true] %s349
      %355 = dma.vmem_to_hbm [thread:$0]  %s350, 512, %s5, [#allocation4], 128, 128, 8
    $region29: #{tpu_custom_call.1} parent=1 // pred_fallthru
      _
    // Predicated region
    $region30: #{tpu_custom_call.1} parent=1 // pred_check
      _
    $region31: #{tpu_custom_call.1} parent=1 // pred_check_branch
      %357 = sbr.rel (0) target = $region33
    $region32: #{tpu_custom_call.1} parent=1 // pred_region
      %358 = dma.done [#allocation4], 512
    $region33: #{tpu_custom_call.1} parent=1 // pred_fallthru
      _
    %359 = vsyncpa [#allocation3], 1
    %360 = vsyncpa [#allocation4], 1

</llo_original>
